<compile_context>
chip_gen: v5e
topology: v5e:2x2
jax: 0.10.0
libtpu: 0.0.40
codegen_flags: <defaults>
</compile_context>

<pallas_src>
import jax
import jax.numpy as jnp
from jax import lax
from jax.experimental import pallas as pl
from jax.experimental.pallas import tpu as pltpu


# ----------------------------------------------------------------------------
# Fused Pallas kernel: all GCN layers in one body, intermediates stay in VMEM.
# ----------------------------------------------------------------------------
def _make_fused_gcn_kernel(num_layers, dims, row_tile):
    """dims: static list of (din, dout) per layer.

    Ref layout: (a_ref [N,N] bf16, x_ref [N,din0] bf16,
                 w_ref [L,dmax_in,dmax_out] bf16, v_ref [L,3,dmax_out] f32,
                 o_ref [row_tile, out_dim] f32)
    """

    def kernel(a_ref, x_ref, w_ref, v_ref, o_ref):
        row0 = pl.multiple_of(pl.program_id(0) * row_tile, row_tile)

        h = x_ref[...]                         # [N, din0] bf16
        w_all = w_ref[...]                     # [L, dmax_in, dmax_out] bf16
        v_all = v_ref[...]                     # [L, 3, dmax_out] f32

        # Full adjacency only needed by the non-last layers (all rows).
        a_full = None
        if num_layers > 1:
            a_full = a_ref[...].astype(jnp.float32)      # [N, N] f32

        for l in range(num_layers):
            din, dout = dims[l]
            last = l == num_layers - 1
            w = w_all[l, :din, :dout]                    # [din, dout] bf16
            b = v_all[l, 0:1, :dout]                     # [1, dout]   f32

            # Transform then aggregate: A_hat @ (H @ W).
            # Intermediate stays f32 (no bf16 round-trip inside a layer).
            xw = jnp.dot(h, w, preferred_element_type=jnp.float32)  # [N, dout] f32

            if last:
                # Only this program's row tile of the final output.
                a_rows = a_ref[pl.ds(row0, row_tile), :].astype(jnp.float32)
                y = jnp.dot(a_rows, xw, preferred_element_type=jnp.float32)
                y = jnp.maximum(y + b, 0.0)              # bias + ReLU
                o_ref[...] = y.astype(o_ref.dtype)
            else:
                y = jnp.dot(a_full, xw, preferred_element_type=jnp.float32)
                y = jnp.maximum(y + b, 0.0)              # bias + ReLU
                # nn.LayerNorm over feature dim (biased var, eps=1e-5), f32.
                gamma = v_all[l, 1:2, :dout]
                beta = v_all[l, 2:3, :dout]
                mean = jnp.mean(y, axis=-1, keepdims=True)
                var = jnp.mean((y - mean) ** 2, axis=-1, keepdims=True)
                y = (y - mean) * lax.rsqrt(var + 1e-5)
                y = y * gamma + beta
                h = y.astype(jnp.bfloat16)               # next layer's MXU input

    return kernel


# ----------------------------------------------------------------------------
# Wrapper: one pallas_call for the whole forward pass.
# ----------------------------------------------------------------------------
def gcn_encoder_forward(x, a_hat, params, *, num_layers, row_tile=64):
    """Forward pass of GCNEncoder. Returns final node embeddings [N, out_dim]."""
    n, in_dim = x.shape
    dims = tuple((w.shape[0], w.shape[1]) for (w, _, _, _) in params)
    out_dim = dims[-1][1]
    dmax_in = max(d for d, _ in dims)
    dmax_out = max(d for _, d in dims)

    # Row-parallel grid axis (v7x megacore); fall back to one tile if it
    # doesn't divide N cleanly.
    if row_tile is None or n % row_tile != 0 or row_tile % 8 != 0:
        row_tile = n
    grid = (n // row_tile,)

    # Pack per-layer params into two stacked tensors (few DMAs instead of 10):
    #   w_packed  [L, dmax_in, dmax_out]  bf16 (zero padded)
    #   v_packed  [L, 3, dmax_out]        f32  (rows: bias, gamma, beta)
    w_packed = jnp.zeros((num_layers, dmax_in, dmax_out), jnp.bfloat16)
    v_packed = jnp.zeros((num_layers, 3, dmax_out), jnp.float32)
    for l, (w, b, gamma, beta) in enumerate(params):
        din, dout = dims[l]
        w_packed = w_packed.at[l, :din, :dout].set(w.astype(jnp.bfloat16))
        v_packed = v_packed.at[l, 0, :dout].set(b.reshape(-1))
        v_packed = v_packed.at[l, 1, :dout].set(gamma.reshape(-1))
        v_packed = v_packed.at[l, 2, :dout].set(beta.reshape(-1))

    kernel = _make_fused_gcn_kernel(num_layers, dims, row_tile)

    in_specs = [
        pl.BlockSpec((n, n), lambda i: (0, 0)),                       # A_hat (bf16)
        pl.BlockSpec((n, in_dim), lambda i: (0, 0)),                  # X (bf16)
        pl.BlockSpec((num_layers, dmax_in, dmax_out), lambda i: (0, 0, 0)),  # W pack
        pl.BlockSpec((num_layers, 3, dmax_out), lambda i: (0, 0, 0)),        # b/g/beta
    ]
    out_specs = pl.BlockSpec((row_tile, out_dim), lambda i: (i, 0))

    return pl.pallas_call(
        kernel,
        out_shape=jax.ShapeDtypeStruct((n, out_dim), jnp.float32),
        grid=grid,
        in_specs=in_specs,
        out_specs=out_specs,
        compiler_params=pltpu.CompilerParams(
            dimension_semantics=("parallel",)),
    )(a_hat.astype(jnp.bfloat16), x.astype(jnp.bfloat16), w_packed, v_packed)


# ----------------------------------------------------------------------------
# Graph / parameter construction (plain-JAX glue)
# ----------------------------------------------------------------------------
def build_gcn_adj(edge_index, num_nodes, dtype=jnp.bfloat16):
    """Dense D^{-1/2} (A + I) D^{-1/2}, matching PyG GCNConv gcn_norm.

    Scaling is fused with the cast so the bf16 A_hat is produced directly
    (no separate full [N, N] recast pass at the pallas_call site)."""
    src, dst = edge_index[0], edge_index[1]
    loop = jnp.arange(num_nodes, dtype=src.dtype)
    src = jnp.concatenate([src, loop])
    dst = jnp.concatenate([dst, loop])
    w = jnp.ones(src.shape[0], jnp.float32)  # edge_weight = None -> ones
    a = jnp.zeros((num_nodes, num_nodes), jnp.float32).at[dst, src].add(w)
    deg = a.sum(axis=1)
    dinv = jnp.where(deg > 0, 1.0 / jnp.sqrt(deg), 0.0)
    return (dinv[:, None] * a * dinv[None, :]).astype(dtype)


def init_params(key, num_layers, in_dim, num_hidden, out_dim):
    dims = []
    if num_layers == 1:
        dims.append((in_dim, out_dim))
    else:
        dims.append((in_dim, num_hidden))
        for _ in range(1, num_layers - 1):
            dims.append((num_hidden, num_hidden))
        dims.append((num_hidden, out_dim))
    params = []
    for (din, dout) in dims:
        key, kw = jax.random.split(key)
        scale = jnp.sqrt(6.0 / (din + dout))  # glorot, like PyG GCNConv
        w = jax.random.uniform(kw, (din, dout), jnp.float32, -scale, scale)
        b = jnp.zeros((dout,), jnp.float32)
        gamma = jnp.ones((dout,), jnp.float32)   # LayerNorm weight
        beta = jnp.zeros((dout,), jnp.float32)   # LayerNorm bias
        params.append((w, b, gamma, beta))
    return params


def gcn_reference(x, a_hat, params, num_layers):
    """Pure-JAX f32 reference of the same forward pass."""
    h = x
    for l in range(num_layers):
        w, b, gamma, beta = params[l]
        h = a_hat @ (h @ w) + b
        h = jnp.maximum(h, 0.0)
        if l != num_layers - 1:
            mean = jnp.mean(h, axis=-1, keepdims=True)
            var = jnp.mean((h - mean) ** 2, axis=-1, keepdims=True)
            h = (h - mean) * lax.rsqrt(var + 1e-5)
            h = h * gamma + beta
    return h


# ----------------------------------------------------------------------------
if __name__ == "__main__":
    key = jax.random.PRNGKey(0)

    num_nodes = 128
    num_edges = 512
    num_layers = 2
    in_dim = 16
    num_hidden = 64
    out_dim = 32

    k_feat, k_src, k_dst, k_param = jax.random.split(key, 4)
    x = jax.random.normal(k_feat, (num_nodes, in_dim), jnp.float32)
    edge_index = jnp.stack([
        jax.random.randint(k_src, (num_edges,), 0, num_nodes),
        jax.random.randint(k_dst, (num_edges,), 0, num_nodes),
    ])

    a_hat = build_gcn_adj(edge_index, num_nodes)            # bf16 [N, N]
    params = init_params(k_param, num_layers, in_dim, num_hidden, out_dim)
    x_bf16 = x.astype(jnp.bfloat16)                          # cast once upstream

    out = gcn_encoder_forward(x_bf16, a_hat, params, num_layers=num_layers)
    out = jax.block_until_ready(out)

    assert out.shape == (num_nodes, out_dim)
    assert jnp.all(jnp.isfinite(out))

    # Reference uses the SAME bf16-quantized operands (x, A_hat, W) upcast to
    # f32 and exact f32 math, so the comparison isolates the kernel's own
    # arithmetic (f32 accumulation / f32 intra-layer intermediates) and the
    # tolerance can be much tighter than the previous 0.1.
    params_q = [(w.astype(jnp.bfloat16).astype(jnp.float32), b, g, be)
                for (w, b, g, be) in params]
    ref = gcn_reference(x_bf16.astype(jnp.float32),
                        a_hat.astype(jnp.float32), params_q, num_layers)
    max_err = float(jnp.max(jnp.abs(out - ref)))
    assert max_err < 3e-2, f"max abs error vs reference too large: {max_err}"

    print("KERNEL_OK")
</pallas_src>

<mosaic_0001>
module attributes {stable_mosaic.version = 11 : i64} {
  func.func @kernel(%arg0: i32, %arg1: memref<128x128xbf16, #tpu.memory_space<vmem>>, %arg2: memref<128x16xbf16, #tpu.memory_space<vmem>>, %arg3: memref<2x64x64xbf16, #tpu.memory_space<vmem>>, %arg4: memref<2x3x64xf32, #tpu.memory_space<vmem>>, %arg5: memref<64x32xf32, #tpu.memory_space<vmem>>) attributes {dimension_semantics = [#tpu.dimension_semantics<parallel>], iteration_bounds = array<i64: 2>, scalar_prefetch = 0 : i64, scratch_operands = 0 : i64, tpu.core_type = #tpu.core_type<tc>, window_params = [{pipeline_mode = #tpu.pipeline_mode<synchronous>, transform_indices = @transform_0, window_bounds = array<i64: 128, 128>}, {pipeline_mode = #tpu.pipeline_mode<synchronous>, transform_indices = @transform_1, window_bounds = array<i64: 128, 16>}, {pipeline_mode = #tpu.pipeline_mode<synchronous>, transform_indices = @transform_2, window_bounds = array<i64: 2, 64, 64>}, {pipeline_mode = #tpu.pipeline_mode<synchronous>, transform_indices = @transform_3, window_bounds = array<i64: 2, 3, 64>}, {transform_indices = @transform_4, window_bounds = array<i64: 64, 32>}]} {
    %c64_i32 = arith.constant 64 : i32
    %0 = arith.muli %arg0, %c64_i32 : i32
    %1 = tpu.assume_multiple %0, 64 : i32
    %c0 = arith.constant 0 : index
    %c0_0 = arith.constant 0 : index
    %2 = vector.load %arg2[%c0, %c0_0] : memref<128x16xbf16, #tpu.memory_space<vmem>>, vector<128x16xbf16>
    %c0_1 = arith.constant 0 : index
    %c0_2 = arith.constant 0 : index
    %c0_3 = arith.constant 0 : index
    %3 = vector.load %arg3[%c0_1, %c0_2, %c0_3] : memref<2x64x64xbf16, #tpu.memory_space<vmem>>, vector<2x64x64xbf16>
    %c0_4 = arith.constant 0 : index
    %c0_5 = arith.constant 0 : index
    %c0_6 = arith.constant 0 : index
    %4 = vector.load %arg4[%c0_4, %c0_5, %c0_6] : memref<2x3x64xf32, #tpu.memory_space<vmem>>, vector<2x3x64xf32>
    %c0_7 = arith.constant 0 : index
    %c0_8 = arith.constant 0 : index
    %5 = vector.load %arg1[%c0_7, %c0_8] : memref<128x128xbf16, #tpu.memory_space<vmem>>, vector<128x128xbf16>
    %6 = arith.extf %5 : vector<128x128xbf16> to vector<128x128xf32>
    %7 = vector.extract_strided_slice %3 {offsets = [0, 0, 0], sizes = [1, 16, 64], strides = [1, 1, 1]} : vector<2x64x64xbf16> to vector<1x16x64xbf16>
    %8 = vector.shape_cast %7 : vector<1x16x64xbf16> to vector<16x64xbf16>
    %9 = vector.extract_strided_slice %4 {offsets = [0, 0, 0], sizes = [1, 1, 64], strides = [1, 1, 1]} : vector<2x3x64xf32> to vector<1x1x64xf32>
    %10 = vector.shape_cast %9 : vector<1x1x64xf32> to vector<1x64xf32>
    %cst = arith.constant dense<0.000000e+00> : vector<128x64xf32>
    %11 = tpu.matmul %2, %8, %cst {dimension_numbers = #tpu.dot_dimension_numbers<[1], [0], [0], [1], [0, 0, 1, 1], [], []>} : vector<128x16xbf16>, vector<16x64xbf16>, vector<128x64xf32> -> vector<128x64xf32>
    %cst_9 = arith.constant dense<0.000000e+00> : vector<128x64xf32>
    %12 = tpu.matmul %6, %11, %cst_9 {dimension_numbers = #tpu.dot_dimension_numbers<[1], [0], [0], [1], [0, 0, 1, 1], [], []>} : vector<128x128xf32>, vector<128x64xf32>, vector<128x64xf32> -> vector<128x64xf32>
    %13 = vector.broadcast %10 : vector<1x64xf32> to vector<128x64xf32>
    %14 = arith.addf %12, %13 : vector<128x64xf32>
    %cst_10 = arith.constant 0.000000e+00 : f32
    %15 = vector.broadcast %cst_10 : f32 to vector<128x64xf32>
    %16 = arith.maximumf %14, %15 : vector<128x64xf32>
    %17 = vector.extract_strided_slice %4 {offsets = [0, 1, 0], sizes = [1, 1, 64], strides = [1, 1, 1]} : vector<2x3x64xf32> to vector<1x1x64xf32>
    %18 = vector.shape_cast %17 : vector<1x1x64xf32> to vector<1x64xf32>
    %19 = vector.extract_strided_slice %4 {offsets = [0, 2, 0], sizes = [1, 1, 64], strides = [1, 1, 1]} : vector<2x3x64xf32> to vector<1x1x64xf32>
    %20 = vector.shape_cast %19 : vector<1x1x64xf32> to vector<1x64xf32>
    %cst_11 = arith.constant dense<0.000000e+00> : vector<128xf32>
    %21 = vector.multi_reduction <add>, %16, %cst_11 [1] : vector<128x64xf32> to vector<128xf32>
    %22 = vector.shape_cast %21 : vector<128xf32> to vector<128x1xf32>
    %cst_12 = arith.constant 6.400000e+01 : f32
    %23 = vector.broadcast %cst_12 : f32 to vector<128x1xf32>
    %24 = arith.divf %22, %23 : vector<128x1xf32>
    %25 = vector.broadcast %24 : vector<128x1xf32> to vector<128x64xf32>
    %26 = arith.subf %16, %25 : vector<128x64xf32>
    %27 = arith.mulf %26, %26 : vector<128x64xf32>
    %cst_13 = arith.constant dense<0.000000e+00> : vector<128xf32>
    %28 = vector.multi_reduction <add>, %27, %cst_13 [1] : vector<128x64xf32> to vector<128xf32>
    %29 = vector.shape_cast %28 : vector<128xf32> to vector<128x1xf32>
    %cst_14 = arith.constant 6.400000e+01 : f32
    %30 = vector.broadcast %cst_14 : f32 to vector<128x1xf32>
    %31 = arith.divf %29, %30 : vector<128x1xf32>
    %32 = vector.broadcast %24 : vector<128x1xf32> to vector<128x64xf32>
    %33 = arith.subf %16, %32 : vector<128x64xf32>
    %cst_15 = arith.constant 9.99999974E-6 : f32
    %34 = vector.broadcast %cst_15 : f32 to vector<128x1xf32>
    %35 = arith.addf %31, %34 : vector<128x1xf32>
    %36 = math.rsqrt %35 : vector<128x1xf32>
    %37 = vector.broadcast %36 : vector<128x1xf32> to vector<128x64xf32>
    %38 = arith.mulf %33, %37 : vector<128x64xf32>
    %39 = vector.broadcast %18 : vector<1x64xf32> to vector<128x64xf32>
    %40 = arith.mulf %38, %39 : vector<128x64xf32>
    %41 = vector.broadcast %20 : vector<1x64xf32> to vector<128x64xf32>
    %42 = arith.addf %40, %41 : vector<128x64xf32>
    %43 = arith.truncf %42 : vector<128x64xf32> to vector<128x64xbf16>
    %44 = vector.extract_strided_slice %3 {offsets = [1, 0, 0], sizes = [1, 64, 32], strides = [1, 1, 1]} : vector<2x64x64xbf16> to vector<1x64x32xbf16>
    %45 = vector.shape_cast %44 : vector<1x64x32xbf16> to vector<64x32xbf16>
    %46 = vector.extract_strided_slice %4 {offsets = [1, 0, 0], sizes = [1, 1, 32], strides = [1, 1, 1]} : vector<2x3x64xf32> to vector<1x1x32xf32>
    %47 = vector.shape_cast %46 : vector<1x1x32xf32> to vector<1x32xf32>
    %cst_16 = arith.constant dense<0.000000e+00> : vector<128x32xf32>
    %48 = tpu.matmul %43, %45, %cst_16 {dimension_numbers = #tpu.dot_dimension_numbers<[1], [0], [0], [1], [0, 0, 1, 1], [], []>} : vector<128x64xbf16>, vector<64x32xbf16>, vector<128x32xf32> -> vector<128x32xf32>
    %49 = arith.index_cast %1 : i32 to index
    %c0_17 = arith.constant 0 : index
    %50 = vector.load %arg1[%49, %c0_17] : memref<128x128xbf16, #tpu.memory_space<vmem>>, vector<64x128xbf16>
    %51 = arith.extf %50 : vector<64x128xbf16> to vector<64x128xf32>
    %cst_18 = arith.constant dense<0.000000e+00> : vector<64x32xf32>
    %52 = tpu.matmul %51, %48, %cst_18 {dimension_numbers = #tpu.dot_dimension_numbers<[1], [0], [0], [1], [0, 0, 1, 1], [], []>} : vector<64x128xf32>, vector<128x32xf32>, vector<64x32xf32> -> vector<64x32xf32>
    %53 = vector.broadcast %47 : vector<1x32xf32> to vector<64x32xf32>
    %54 = arith.addf %52, %53 : vector<64x32xf32>
    %cst_19 = arith.constant 0.000000e+00 : f32
    %55 = vector.broadcast %cst_19 : f32 to vector<64x32xf32>
    %56 = arith.maximumf %54, %55 : vector<64x32xf32>
    %c0_20 = arith.constant 0 : index
    %c0_21 = arith.constant 0 : index
    %57 = vector.load %arg5[%c0_20, %c0_21] : memref<64x32xf32, #tpu.memory_space<vmem>>, vector<64x32xf32>
    tpu.vector_store %arg5[%c0_20, %c0_21], %56 {strides = array<i32>} : memref<64x32xf32, #tpu.memory_space<vmem>>, vector<64x32xf32>,
    return
  }
  func.func @transform_0(%arg0: i32) -> (i32, i32) {
    %c0_i32 = arith.constant 0 : i32
    %c0_i32_0 = arith.constant 0 : i32
    %c0_i32_1 = arith.constant 0 : i32
    return %c0_i32, %c0_i32_0 : i32, i32
  }
  func.func @transform_1(%arg0: i32) -> (i32, i32) {
    %c0_i32 = arith.constant 0 : i32
    %c0_i32_0 = arith.constant 0 : i32
    %c0_i32_1 = arith.constant 0 : i32
    return %c0_i32, %c0_i32_0 : i32, i32
  }
  func.func @transform_2(%arg0: i32) -> (i32, i32, i32) {
    %c0_i32 = arith.constant 0 : i32
    %c0_i32_0 = arith.constant 0 : i32
    %c0_i32_1 = arith.constant 0 : i32
    %c0_i32_2 = arith.constant 0 : i32
    return %c0_i32, %c0_i32_0, %c0_i32_1 : i32, i32, i32
  }
  func.func @transform_3(%arg0: i32) -> (i32, i32, i32) {
    %c0_i32 = arith.constant 0 : i32
    %c0_i32_0 = arith.constant 0 : i32
    %c0_i32_1 = arith.constant 0 : i32
    %c0_i32_2 = arith.constant 0 : i32
    return %c0_i32, %c0_i32_0, %c0_i32_1 : i32, i32, i32
  }
  func.func @transform_4(%arg0: i32) -> (i32, i32) {
    %c0_i32 = arith.constant 0 : i32
    %c0_i32_0 = arith.constant 0 : i32
    return %arg0, %c0_i32 : i32, i32
  }
}

</mosaic_0001>

<llo_original>
// kernel: tpu_custom_call.1
$region0: #{tpu_custom_call.1}
  #allocation0 [shape = 'u32[]', space=smem, size = 0x4, offset = 0x4, fixed_abs, tag = 'smem constant byte address 0x4 - core index']
  #allocation1 [shape = 'u32[72,128]{1,0:T(1,128)}', space=vmem, size = 0x9000, scoped, tag = 'internal scratch']
  %s0 = inlined_call_operand.vmem [shape: bf16[128,128], index: 0, kind: input, shape index: {}]
  %s1 = inlined_call_operand.vmem [shape: bf16[128,16], index: 1, kind: input, shape index: {}]
  %s2 = inlined_call_operand.hbm [shape: bf16[2,64,64], index: 2, kind: input, shape index: {}]
  %s3 = inlined_call_operand.vmem [shape: f32[2,3,64], index: 3, kind: input, shape index: {}]
  %s4 = inlined_call_operand.vmem [shape: f32[128,32], index: 4, kind: output, shape index: {}]
  %s5 = sld [smem:[#allocation0]]
  $region53: #{tpu_custom_call.1} parent=0
    _
  %s7 = ssub.s32 1, %s5
  %s8 = scalar_select 0, %s7, %s5
  $region1: #{tpu_custom_call.1} parent=0
    #allocation2 [shape = 'u8[32768]{0}', space=vmem, size = 0x8000, scoped, tag = 'input window, operand 2, single buffered']
    #allocation3 [shape = 's32[2]{0}', space=sflag, size = 0x8, scoped, tag = 'scoped memory for tpu_custom_call.1']
    %9 = vsyncpa [#allocation3], 0
    loop: start=0, step=1, limit=4
    $region2: #{tpu_custom_call.1} parent=1 // loop_pre_header
      _
    $region3: #{tpu_custom_call.1} parent=1 // loop_header
      %s11 = sphi 0, %s15
      %p12 = scmp.ge.s32.totalorder %s11, 4
      %s19 = sphi 0, %s19
      %s21 = sphi 0, %s19
      %s22 = sphi 0, %s21
      %s36 = sphi 0, %s22
      %s40 = sphi 0, %s40
      %s42 = sphi 0, %s40
      %s43 = sphi 0, %s42
      %s57 = sphi 0, %s43
      %s61 = sphi 0, %s61
      %s63 = sphi 0, %s61
      %s64 = sphi 0, %s63
      %s78 = sphi 0, %s64
      %s82 = sphi 0, %s82
      %s84 = sphi 0, %s82
      %s85 = sphi 0, %s84
      %s99 = sphi 0, %s85
      %s105 = sphi 0, %s107
      %s108 = sphi 0, %s105
      %s109 = sphi 0, %s108
      %s125 = sphi 0, %s109
    $region4: #{tpu_custom_call.1} parent=1 // loop_header_branch
      %14 = sbr.rel (%p12) target = $region8
    $region5: #{tpu_custom_call.1} parent=1 // loop_body
      %s16 = ssub.s32 %s11, 1
      %s17 = ssub.s32 %s11, 2
      %s18 = sadd.s32 %s11, 1
      %s20 = sadd.s32 %s19, 1
      %p23 = scmp.eq.s32.totalorder %s11, 1
      %p24 = scmp.ne.s32.totalorder %s19, %s21
      %p25 = scmp.eq.s32.totalorder %s11, 0
      %p26 = por %p24, %p25
      %p27 = scmp.ne.s32.totalorder %s19, %s21
      %p28 = scmp.eq.s32.totalorder %s16, 1
      %p29 = por %p27, %p28
      %p30 = scmp.ne.s32.totalorder %s21, %s22
      %p31 = scmp.eq.s32.totalorder %s16, 0
      %p32 = por %p30, %p31
      %p33 = scmp.ne.s32.totalorder %s21, %s22
      %p34 = scmp.eq.s32.totalorder %s17, 1
      %p35 = por %p33, %p34
      %p37 = scmp.ne.s32.totalorder %s22, %s36
      %p38 = scmp.eq.s32.totalorder %s17, 0
      %p39 = por %p37, %p38
      %s41 = sadd.s32 %s40, 1
      %p44 = scmp.eq.s32.totalorder %s11, 1
      %p45 = scmp.ne.s32.totalorder %s40, %s42
      %p46 = scmp.eq.s32.totalorder %s11, 0
      %p47 = por %p45, %p46
      %p48 = scmp.ne.s32.totalorder %s40, %s42
      %p49 = scmp.eq.s32.totalorder %s16, 1
      %p50 = por %p48, %p49
      %p51 = scmp.ne.s32.totalorder %s42, %s43
      %p52 = scmp.eq.s32.totalorder %s16, 0
      %p53 = por %p51, %p52
      %p54 = scmp.ne.s32.totalorder %s42, %s43
      %p55 = scmp.eq.s32.totalorder %s17, 1
      %p56 = por %p54, %p55
      %p58 = scmp.ne.s32.totalorder %s43, %s57
      %p59 = scmp.eq.s32.totalorder %s17, 0
      %p60 = por %p58, %p59
      %s62 = sadd.s32 %s61, 1
      %p65 = scmp.eq.s32.totalorder %s11, 1
      %p66 = scmp.ne.s32.totalorder %s61, %s63
      %p67 = scmp.eq.s32.totalorder %s11, 0
      %p68 = por %p66, %p67
      %p69 = scmp.ne.s32.totalorder %s61, %s63
      %p70 = scmp.eq.s32.totalorder %s16, 1
      %p71 = por %p69, %p70
      %p72 = scmp.ne.s32.totalorder %s63, %s64
      %p73 = scmp.eq.s32.totalorder %s16, 0
      %p74 = por %p72, %p73
      %p75 = scmp.ne.s32.totalorder %s63, %s64
      %p76 = scmp.eq.s32.totalorder %s17, 1
      %p77 = por %p75, %p76
      %p79 = scmp.ne.s32.totalorder %s64, %s78
      %p80 = scmp.eq.s32.totalorder %s17, 0
      %p81 = por %p79, %p80
      %s83 = sadd.s32 %s82, 1
      %p86 = scmp.eq.s32.totalorder %s11, 1
      %p87 = scmp.ne.s32.totalorder %s82, %s84
      %p88 = scmp.eq.s32.totalorder %s11, 0
      %p89 = por %p87, %p88
      %p90 = scmp.ne.s32.totalorder %s82, %s84
      %p91 = scmp.eq.s32.totalorder %s16, 1
      %p92 = por %p90, %p91
      %p93 = scmp.ne.s32.totalorder %s84, %s85
      %p94 = scmp.eq.s32.totalorder %s16, 0
      %p95 = por %p93, %p94
      %p96 = scmp.ne.s32.totalorder %s84, %s85
      %p97 = scmp.eq.s32.totalorder %s17, 1
      %p98 = por %p96, %p97
      %p100 = scmp.ne.s32.totalorder %s85, %s99
      %p101 = scmp.eq.s32.totalorder %s17, 0
      %p102 = por %p100, %p101
      %s103 = ssub.s32 %s11, %s18
      %p104 = scmp.eq.s32.totalorder %s103, 0
      %s106 = sadd.s32 %s105, 1
      %s107 = scalar_select %p104, %s105, %s106
      %p110 = pneg %p104
      %p111 = scmp.eq.s32.totalorder %s11, 1
      %p112 = por %p110, %p111
      %p113 = scmp.ne.s32.totalorder %s105, %s108
      %p114 = scmp.eq.s32.totalorder %s11, 0
      %p115 = por %p113, %p114
      %p116 = scmp.ne.s32.totalorder %s105, %s108
      %p117 = scmp.eq.s32.totalorder %s16, 1
      %p118 = por %p116, %p117
      %p119 = scmp.ne.s32.totalorder %s108, %s109
      %p120 = scmp.eq.s32.totalorder %s16, 0
      %p121 = por %p119, %p120
      %p122 = scmp.ne.s32.totalorder %s108, %s109
      %p123 = scmp.eq.s32.totalorder %s17, 1
      %p124 = por %p122, %p123
      %p126 = scmp.ne.s32.totalorder %s109, %s125
      %p127 = scmp.eq.s32.totalorder %s17, 0
      %p128 = por %p126, %p127
      %p129 = scmp.le.s32.totalorder 1, %s11
      %p130 = scmp.lt.s32.totalorder %s11, 3
      %p131 = pnand %p129, %p130
      %p132 = pneg %p131
      // Predicated region
      $region9: #{tpu_custom_call.1} parent=5 // pred_check
        _
      $region10: #{tpu_custom_call.1} parent=5 // pred_check_branch
        %134 = sbr.rel (%p131) target = $region12
      $region11: #{tpu_custom_call.1} parent=5 // pred_region
        %s135 = ssub.s32 %s11, 1
        // Predicated region
        $region13: #{tpu_custom_call.1} parent=11 // pred_check
          %p136 = pneg %p32
        $region14: #{tpu_custom_call.1} parent=11 // pred_check_branch
          %138 = sbr.rel (%p136) target = $region16
        $region15: #{tpu_custom_call.1} parent=11 // pred_region
          _
        $region16: #{tpu_custom_call.1} parent=11 // pred_fallthru
          _
        // Predicated region
        $region17: #{tpu_custom_call.1} parent=11 // pred_check
          %p139 = pneg %p53
        $region18: #{tpu_custom_call.1} parent=11 // pred_check_branch
          %141 = sbr.rel (%p139) target = $region20
        $region19: #{tpu_custom_call.1} parent=11 // pred_region
          _
        $region20: #{tpu_custom_call.1} parent=11 // pred_fallthru
          _
        // Predicated region
        $region21: #{tpu_custom_call.1} parent=11 // pred_check
          %p142 = pneg %p74
        $region22: #{tpu_custom_call.1} parent=11 // pred_check_branch
          %144 = sbr.rel (%p142) target = $region24
        $region23: #{tpu_custom_call.1} parent=11 // pred_region
          %146 = vsyncadd [#allocation3], 0
          %s147 = sshll.u32 %s2, 4
          %s148 = int_to_ptr.hbm [resolvable:$true] %s147
          %s149 = sshll.u32 [#allocation2], 4
          %s150 = int_to_ptr.vmem [resolvable:$true] %s149
          %155 = dma.hbm_to_vmem [thread:$0]  %s148, 1024, %s150, [#allocation3], 64, 64, 4
        $region24: #{tpu_custom_call.1} parent=11 // pred_fallthru
          _
        // Predicated region
        $region25: #{tpu_custom_call.1} parent=11 // pred_check
          %p156 = pneg %p95
        $region26: #{tpu_custom_call.1} parent=11 // pred_check_branch
          %158 = sbr.rel (%p156) target = $region28
        $region27: #{tpu_custom_call.1} parent=11 // pred_region
          _
        $region28: #{tpu_custom_call.1} parent=11 // pred_fallthru
          _
      $region12: #{tpu_custom_call.1} parent=5 // pred_fallthru
        _
      %p159 = scmp.lt.s32.totalorder %s11, 2
      // Predicated region
      $region29: #{tpu_custom_call.1} parent=5 // pred_check
        %p160 = pneg %p159
      $region30: #{tpu_custom_call.1} parent=5 // pred_check_branch
        %162 = sbr.rel (%p160) target = $region32
      $region31: #{tpu_custom_call.1} parent=5 // pred_region
        _
      $region32: #{tpu_custom_call.1} parent=5 // pred_fallthru
        _
      %p163 = scmp.le.s32.totalorder 1, %s11
      %p164 = scmp.lt.s32.totalorder %s11, 3
      %p165 = pnand %p163, %p164
      %p166 = pneg %p165
      // Predicated region
      $region33: #{tpu_custom_call.1} parent=5 // pred_check
        _
      $region34: #{tpu_custom_call.1} parent=5 // pred_check_branch
        %168 = sbr.rel (%p165) target = $region36
      $region35: #{tpu_custom_call.1} parent=5 // pred_region
        %s169 = ssub.s32 %s11, 1
        // Predicated region
        $region37: #{tpu_custom_call.1} parent=35 // pred_check
          %p170 = pneg %p74
        $region38: #{tpu_custom_call.1} parent=35 // pred_check_branch
          %172 = sbr.rel (%p170) target = $region40
        $region39: #{tpu_custom_call.1} parent=35 // pred_region
          %174 = dma.done [#allocation3], 1024
        $region40: #{tpu_custom_call.1} parent=35 // pred_fallthru
          _
        %p175 = pneg %p32
        %p176 = pneg %p29
        %p177 = pneg %p53
        %p178 = pneg %p50
        %p179 = pneg %p74
        %p180 = pneg %p71
        %p181 = pneg %p95
        %p182 = pneg %p92
        %p183 = pneg %p121
        %p184 = pneg %p118
        %s185 = smul.u32 8, %s16
        %p186 = scmp.lt.s32.totalorder %s185, 15
        %s187 = scalar_select %p186, %s185, 15
        %s188 = smul.addr %s187, 8
        %s189 = scalar_lea.vmem %s4, %s188
        %s190 = smul.u32 8, %s16
        %p191 = scmp.lt.s32.totalorder %s190, 15
        %s192 = scalar_select %p191, %s190, 15
        %s193 = smul.addr %s192, 8
        %s194 = scalar_lea.vmem %s4, %s193
        %s195 = smul.u32 8, %s16
        %s197 = smul.u32 %s16, 64
        %v198 = vld [vmem:[%s1] sm:$0xf]
        %v199 = vld [vmem:[%s1 + $0x4] sm:$0xf]
        %v200 = vld [vmem:[%s1 + $0x8] sm:$0xf]
        %v201 = vld [vmem:[%s1 + $0xc] sm:$0xf]
        %v202 = vld [vmem:[%s1 + $0x10] sm:$0xf]
        %v203 = vld [vmem:[%s1 + $0x14] sm:$0xf]
        %v204 = vld [vmem:[%s1 + $0x18] sm:$0xf]
        %v205 = vld [vmem:[%s1 + $0x1c] sm:$0xf]
        %v206 = vld [vmem:[%s1 + $0x20] sm:$0xf]
        %v207 = vld [vmem:[%s1 + $0x24] sm:$0xf]
        %v208 = vld [vmem:[%s1 + $0x28] sm:$0xf]
        %v209 = vld [vmem:[%s1 + $0x2c] sm:$0xf]
        %v210 = vld [vmem:[%s1 + $0x30] sm:$0xf]
        %v211 = vld [vmem:[%s1 + $0x34] sm:$0xf]
        %v212 = vld [vmem:[%s1 + $0x38] sm:$0xf]
        %v213 = vld [vmem:[%s1 + $0x3c] sm:$0xf]
        %v214 = vld [vmem:[#allocation2] sm:$0xf]
        %v215 = vld [vmem:[#allocation2 + $0x4] sm:$0xf]
        %v216 = vld [vmem:[#allocation2 + $0x20] sm:$0xf]
        %v217 = vld [vmem:[#allocation2 + $0x24] sm:$0xf]
        %v218 = vld [vmem:[#allocation2 + $0x28] sm:$0xf]
        %v219 = vld [vmem:[#allocation2 + $0x2c] sm:$0xf]
        %v220 = vld [vmem:[#allocation2 + $0x30] sm:$0xf]
        %v221 = vld [vmem:[#allocation2 + $0x34] sm:$0xf]
        %v222 = vld [vmem:[#allocation2 + $0x38] sm:$0xf]
        %v223 = vld [vmem:[#allocation2 + $0x3c] sm:$0xf]
        %v224 = vld [vmem:[%s3] sm:$0x7]
        %v225 = vld [vmem:[%s3 + $0x4] sm:$0x7]
        %v226 = vld [vmem:[%s0] sm:$0xf]
        %v227 = vld [vmem:[%s0 + $0x4] sm:$0xf]
        %v228 = vld [vmem:[%s0 + $0x8] sm:$0xf]
        %v229 = vld [vmem:[%s0 + $0xc] sm:$0xf]
        %v230 = vld [vmem:[%s0 + $0x10] sm:$0xf]
        %v231 = vld [vmem:[%s0 + $0x14] sm:$0xf]
        %v232 = vld [vmem:[%s0 + $0x18] sm:$0xf]
        %v233 = vld [vmem:[%s0 + $0x1c] sm:$0xf]
        %v234 = vld [vmem:[%s0 + $0x20] sm:$0xf]
        %v235 = vld [vmem:[%s0 + $0x24] sm:$0xf]
        %v236 = vld [vmem:[%s0 + $0x28] sm:$0xf]
        %v237 = vld [vmem:[%s0 + $0x2c] sm:$0xf]
        %v238 = vld [vmem:[%s0 + $0x30] sm:$0xf]
        %v239 = vld [vmem:[%s0 + $0x34] sm:$0xf]
        %v240 = vld [vmem:[%s0 + $0x38] sm:$0xf]
        %v241 = vld [vmem:[%s0 + $0x3c] sm:$0xf]
        %v242 = vunpack.c.l.bf16 %v226
        %v243 = vunpack.c.l.bf16 %v227
        %v244 = vunpack.c.l.bf16 %v228
        %v245 = vunpack.c.l.bf16 %v229
        %v246 = vunpack.c.l.bf16 %v230
        %v247 = vunpack.c.l.bf16 %v231
        %v248 = vunpack.c.l.bf16 %v232
        %v249 = vunpack.c.l.bf16 %v233
        %v250 = vunpack.c.l.bf16 %v234
        %v251 = vunpack.c.l.bf16 %v235
        %v252 = vunpack.c.l.bf16 %v236
        %v253 = vunpack.c.l.bf16 %v237
        %v254 = vunpack.c.l.bf16 %v238
        %v255 = vunpack.c.l.bf16 %v239
        %v256 = vunpack.c.l.bf16 %v240
        %v257 = vunpack.c.l.bf16 %v241
        %v274 = vunpack.c.l.b16 %v198
        %v275 = vunpack.c.l.b16 %v199
        %v276 = vunpack.c.l.b16 %v200
        %v277 = vunpack.c.l.b16 %v201
        %v278 = vunpack.c.l.b16 %v202
        %v279 = vunpack.c.l.b16 %v203
        %v280 = vunpack.c.l.b16 %v204
        %v281 = vunpack.c.l.b16 %v205
        %v282 = vunpack.c.l.b16 %v206
        %v283 = vunpack.c.l.b16 %v207
        %v284 = vunpack.c.l.b16 %v208
        %v285 = vunpack.c.l.b16 %v209
        %v286 = vunpack.c.l.b16 %v210
        %v287 = vunpack.c.l.b16 %v211
        %v288 = vunpack.c.l.b16 %v212
        %v289 = vunpack.c.l.b16 %v213
        %v290 = vpack.c.b16 %v275, %v274
        %v291 = vpack.c.b16 %v277, %v276
        %v292 = vpack.c.b16 %v279, %v278
        %v293 = vpack.c.b16 %v281, %v280
        %v294 = vpack.c.b16 %v283, %v282
        %v295 = vpack.c.b16 %v285, %v284
        %v296 = vpack.c.b16 %v287, %v286
        %v297 = vpack.c.b16 %v289, %v288
        %v300 = vunpack.c.l.b16 %v214
        %v301 = vunpack.c.l.b16 %v215
        %v302 = vpack.c.b16 %v301, %v300
        %vm304 = vcmask 130048
        %v306 = vsel %vm304, %v290, 0
        %v309 = vsel %vm304, %v291, 0
        %v312 = vsel %vm304, %v292, 0
        %v315 = vsel %vm304, %v293, 0
        %v318 = vsel %vm304, %v294, 0
        %v321 = vsel %vm304, %v295, 0
        %v324 = vsel %vm304, %v296, 0
        %v327 = vsel %vm304, %v297, 0
        %329 = vmatpush.bf16.msra.mxu0 0
        %330 = vmatpush.bf16.msra.mxu0 0
        %331 = vmatpush.bf16.msra.mxu0 0
        %332 = vmatpush.bf16.msra.mxu0 0
        %333 = vmatpush.bf16.msra.mxu0 0
        %334 = vmatpush.bf16.msra.mxu0 0
        %335 = vmatpush.bf16.msra.mxu0 0
        %336 = vmatpush.bf16.msra.mxu0 %v302
        %337 = vmatmul.bf16.gmra.mxu0 %v306
        %v338 = vpop.f32.mrf.mxu0
        %v339 = vadd.f32 0.0, %v338
        %v340 = vpop.f32.mrf.mxu0
        %v341 = vadd.f32 0.0, %v340
        %342 = vmatmul.bf16.gmra.mxu0 %v309
        %v343 = vpop.f32.mrf.mxu0
        %v344 = vadd.f32 0.0, %v343
        %v345 = vpop.f32.mrf.mxu0
        %v346 = vadd.f32 0.0, %v345
        %347 = vmatmul.bf16.gmra.mxu0 %v312
        %v348 = vpop.f32.mrf.mxu0
        %v349 = vadd.f32 0.0, %v348
        %v350 = vpop.f32.mrf.mxu0
        %v351 = vadd.f32 0.0, %v350
        %352 = vmatmul.bf16.gmra.mxu0 %v315
        %v353 = vpop.f32.mrf.mxu0
        %v354 = vadd.f32 0.0, %v353
        %v355 = vpop.f32.mrf.mxu0
        %v356 = vadd.f32 0.0, %v355
        %357 = vmatmul.bf16.gmra.mxu0 %v318
        %v358 = vpop.f32.mrf.mxu0
        %v359 = vadd.f32 0.0, %v358
        %v360 = vpop.f32.mrf.mxu0
        %v361 = vadd.f32 0.0, %v360
        %362 = vmatmul.bf16.gmra.mxu0 %v321
        %v363 = vpop.f32.mrf.mxu0
        %v364 = vadd.f32 0.0, %v363
        %v365 = vpop.f32.mrf.mxu0
        %v366 = vadd.f32 0.0, %v365
        %367 = vmatmul.bf16.gmra.mxu0 %v324
        %v368 = vpop.f32.mrf.mxu0
        %v369 = vadd.f32 0.0, %v368
        %v370 = vpop.f32.mrf.mxu0
        %v371 = vadd.f32 0.0, %v370
        %372 = vmatmul.bf16.gmra.mxu0 %v327
        %v373 = vpop.f32.mrf.mxu0
        %v374 = vadd.f32 0.0, %v373
        %v375 = vpop.f32.mrf.mxu0
        %v376 = vadd.f32 0.0, %v375
        %377 = vdwg.mxu0
        %v378 = vperm.slane %v224, 0
        %379 = vmatpush.msra.mxu0 %v376
        %380 = vmatpush.msra.mxu0 %v374
        %381 = vmatpush.msra.mxu0 %v371
        %382 = vmatpush.msra.mxu0 %v369
        %383 = vmatpush.msra.mxu0 %v366
        %384 = vmatpush.msra.mxu0 %v364
        %385 = vmatpush.msra.mxu0 %v361
        %386 = vmatpush.msra.mxu0 %v359
        %387 = vmatpush.msra.mxu0 %v356
        %388 = vmatpush.msra.mxu0 %v354
        %389 = vmatpush.msra.mxu0 %v351
        %390 = vmatpush.msra.mxu0 %v349
        %391 = vmatpush.msra.mxu0 %v346
        %392 = vmatpush.msra.mxu0 %v344
        %393 = vmatpush.msra.mxu0 %v341
        %394 = vmatpush.msra.mxu0 %v339
        %395 = vmatmul.f32.gmra.mxu0 %v242
        %v396 = vpop.f32.mrf.mxu0
        %v397 = vadd.f32 %v378, %v396
        %398 = vmatmul.f32.gmra.mxu0 %v243
        %v399 = vpop.f32.mrf.mxu0
        %v400 = vadd.f32 %v378, %v399
        %401 = vmatmul.f32.gmra.mxu0 %v244
        %v402 = vpop.f32.mrf.mxu0
        %v403 = vadd.f32 %v378, %v402
        %404 = vmatmul.f32.gmra.mxu0 %v245
        %v405 = vpop.f32.mrf.mxu0
        %v406 = vadd.f32 %v378, %v405
        %407 = vmatmul.f32.gmra.mxu0 %v246
        %v408 = vpop.f32.mrf.mxu0
        %v409 = vadd.f32 %v378, %v408
        %410 = vmatmul.f32.gmra.mxu0 %v247
        %v411 = vpop.f32.mrf.mxu0
        %v412 = vadd.f32 %v378, %v411
        %413 = vmatmul.f32.gmra.mxu0 %v248
        %v414 = vpop.f32.mrf.mxu0
        %v415 = vadd.f32 %v378, %v414
        %416 = vmatmul.f32.gmra.mxu0 %v249
        %v417 = vpop.f32.mrf.mxu0
        %v418 = vadd.f32 %v378, %v417
        %419 = vmatmul.f32.gmra.mxu0 %v250
        %v420 = vpop.f32.mrf.mxu0
        %v421 = vadd.f32 %v378, %v420
        %422 = vmatmul.f32.gmra.mxu0 %v251
        %v423 = vpop.f32.mrf.mxu0
        %v424 = vadd.f32 %v378, %v423
        %425 = vmatmul.f32.gmra.mxu0 %v252
        %v426 = vpop.f32.mrf.mxu0
        %v427 = vadd.f32 %v378, %v426
        %428 = vmatmul.f32.gmra.mxu0 %v253
        %v429 = vpop.f32.mrf.mxu0
        %v430 = vadd.f32 %v378, %v429
        %431 = vmatmul.f32.gmra.mxu0 %v254
        %v432 = vpop.f32.mrf.mxu0
        %v433 = vadd.f32 %v378, %v432
        %434 = vmatmul.f32.gmra.mxu0 %v255
        %v435 = vpop.f32.mrf.mxu0
        %v436 = vadd.f32 %v378, %v435
        %437 = vmatmul.f32.gmra.mxu0 %v256
        %v438 = vpop.f32.mrf.mxu0
        %v439 = vadd.f32 %v378, %v438
        %440 = vmatmul.f32.gmra.mxu0 %v257
        %v441 = vpop.f32.mrf.mxu0
        %v442 = vadd.f32 %v378, %v441
        %443 = vdwg.mxu0
        %v444 = vmax.f32 %v397, 0.0
        %v445 = vmax.f32 %v400, 0.0
        %v446 = vmax.f32 %v403, 0.0
        %v447 = vmax.f32 %v406, 0.0
        %v448 = vmax.f32 %v409, 0.0
        %v449 = vmax.f32 %v412, 0.0
        %v450 = vmax.f32 %v415, 0.0
        %v451 = vmax.f32 %v418, 0.0
        %v452 = vmax.f32 %v421, 0.0
        %v453 = vmax.f32 %v424, 0.0
        %v454 = vmax.f32 %v427, 0.0
        %v455 = vmax.f32 %v430, 0.0
        %v456 = vmax.f32 %v433, 0.0
        %v457 = vmax.f32 %v436, 0.0
        %v458 = vmax.f32 %v439, 0.0
        %v459 = vmax.f32 %v442, 0.0
        %vm460 = vcmask 523264
        %v461 = vsel %vm460, %v444, 0.0
        %462 = vadd.xlane.f32.xlu0 %v461
        %v463 = vpop.xlane.xlu0 %462
        %v464 = vsel %vm460, %v445, 0.0
        %465 = vadd.xlane.f32.xlu0 %v464
        %v466 = vpop.xlane.xlu0 %465
        %v467 = vsel %vm460, %v446, 0.0
        %468 = vadd.xlane.f32.xlu0 %v467
        %v469 = vpop.xlane.xlu0 %468
        %v470 = vsel %vm460, %v447, 0.0
        %471 = vadd.xlane.f32.xlu0 %v470
        %v472 = vpop.xlane.xlu0 %471
        %v473 = vsel %vm460, %v448, 0.0
        %474 = vadd.xlane.f32.xlu0 %v473
        %v475 = vpop.xlane.xlu0 %474
        %v476 = vsel %vm460, %v449, 0.0
        %477 = vadd.xlane.f32.xlu0 %v476
        %v478 = vpop.xlane.xlu0 %477
        %v479 = vsel %vm460, %v450, 0.0
        %480 = vadd.xlane.f32.xlu0 %v479
        %v481 = vpop.xlane.xlu0 %480
        %v482 = vsel %vm460, %v451, 0.0
        %483 = vadd.xlane.f32.xlu0 %v482
        %v484 = vpop.xlane.xlu0 %483
        %v485 = vsel %vm460, %v452, 0.0
        %486 = vadd.xlane.f32.xlu0 %v485
        %v487 = vpop.xlane.xlu0 %486
        %v488 = vsel %vm460, %v453, 0.0
        %489 = vadd.xlane.f32.xlu0 %v488
        %v490 = vpop.xlane.xlu0 %489
        %v491 = vsel %vm460, %v454, 0.0
        %492 = vadd.xlane.f32.xlu0 %v491
        %v493 = vpop.xlane.xlu0 %492
        %v494 = vsel %vm460, %v455, 0.0
        %495 = vadd.xlane.f32.xlu0 %v494
        %v496 = vpop.xlane.xlu0 %495
        %v497 = vsel %vm460, %v456, 0.0
        %498 = vadd.xlane.f32.xlu0 %v497
        %v499 = vpop.xlane.xlu0 %498
        %v500 = vsel %vm460, %v457, 0.0
        %501 = vadd.xlane.f32.xlu0 %v500
        %v502 = vpop.xlane.xlu0 %501
        %v503 = vsel %vm460, %v458, 0.0
        %504 = vadd.xlane.f32.xlu0 %v503
        %v505 = vpop.xlane.xlu0 %504
        %v506 = vsel %vm460, %v459, 0.0
        %507 = vadd.xlane.f32.xlu0 %v506
        %v508 = vpop.xlane.xlu0 %507
        %v509 = vrcp.pop 64.0
        %v510 = vmul.f32 64.0, %v509
        %v511 = vsub.f32 1.0, %v510
        %v512 = vmul.f32 %v509, %v511
        %v513 = vadd.f32 %v509, %v512
        %vm514 = vweird.f32 %v509
        %v515 = vsel %vm514, %v509, %v513
        %v516 = vmul.f32 %v463, %v515
        %v517 = vmul.f32 %v466, %v515
        %v518 = vmul.f32 %v469, %v515
        %v519 = vmul.f32 %v472, %v515
        %v520 = vmul.f32 %v475, %v515
        %v521 = vmul.f32 %v478, %v515
        %v522 = vmul.f32 %v481, %v515
        %v523 = vmul.f32 %v484, %v515
        %v524 = vmul.f32 %v487, %v515
        %v525 = vmul.f32 %v490, %v515
        %v526 = vmul.f32 %v493, %v515
        %v527 = vmul.f32 %v496, %v515
        %v528 = vmul.f32 %v499, %v515
        %v529 = vmul.f32 %v502, %v515
        %v530 = vmul.f32 %v505, %v515
        %v531 = vmul.f32 %v508, %v515
        %v532 = vsub.f32 %v444, %v516
        %v533 = vsub.f32 %v445, %v517
        %v534 = vsub.f32 %v446, %v518
        %v535 = vsub.f32 %v447, %v519
        %v536 = vsub.f32 %v448, %v520
        %v537 = vsub.f32 %v449, %v521
        %v538 = vsub.f32 %v450, %v522
        %v539 = vsub.f32 %v451, %v523
        %v540 = vsub.f32 %v452, %v524
        %v541 = vsub.f32 %v453, %v525
        %v542 = vsub.f32 %v454, %v526
        %v543 = vsub.f32 %v455, %v527
        %v544 = vsub.f32 %v456, %v528
        %v545 = vsub.f32 %v457, %v529
        %v546 = vsub.f32 %v458, %v530
        %v547 = vsub.f32 %v459, %v531
        %v548 = vmul.f32 %v532, %v532
        %v549 = vmul.f32 %v533, %v533
        %v550 = vmul.f32 %v534, %v534
        %v551 = vmul.f32 %v535, %v535
        %v552 = vmul.f32 %v536, %v536
        %v553 = vmul.f32 %v537, %v537
        %v554 = vmul.f32 %v538, %v538
        %v555 = vmul.f32 %v539, %v539
        %v556 = vmul.f32 %v540, %v540
        %v557 = vmul.f32 %v541, %v541
        %v558 = vmul.f32 %v542, %v542
        %v559 = vmul.f32 %v543, %v543
        %v560 = vmul.f32 %v544, %v544
        %v561 = vmul.f32 %v545, %v545
        %v562 = vmul.f32 %v546, %v546
        %v563 = vmul.f32 %v547, %v547
        %v564 = vsel %vm460, %v548, 0.0
        %565 = vadd.xlane.f32.xlu0 %v564
        %v566 = vpop.xlane.xlu0 %565
        %v567 = vsel %vm460, %v549, 0.0
        %568 = vadd.xlane.f32.xlu0 %v567
        %v569 = vpop.xlane.xlu0 %568
        %v570 = vsel %vm460, %v550, 0.0
        %571 = vadd.xlane.f32.xlu0 %v570
        %v572 = vpop.xlane.xlu0 %571
        %v573 = vsel %vm460, %v551, 0.0
        %574 = vadd.xlane.f32.xlu0 %v573
        %v575 = vpop.xlane.xlu0 %574
        %v576 = vsel %vm460, %v552, 0.0
        %577 = vadd.xlane.f32.xlu0 %v576
        %v578 = vpop.xlane.xlu0 %577
        %v579 = vsel %vm460, %v553, 0.0
        %580 = vadd.xlane.f32.xlu0 %v579
        %v581 = vpop.xlane.xlu0 %580
        %v582 = vsel %vm460, %v554, 0.0
        %583 = vadd.xlane.f32.xlu0 %v582
        %v584 = vpop.xlane.xlu0 %583
        %v585 = vsel %vm460, %v555, 0.0
        %586 = vadd.xlane.f32.xlu0 %v585
        %v587 = vpop.xlane.xlu0 %586
        %v588 = vsel %vm460, %v556, 0.0
        %589 = vadd.xlane.f32.xlu0 %v588
        %v590 = vpop.xlane.xlu0 %589
        %v591 = vsel %vm460, %v557, 0.0
        %592 = vadd.xlane.f32.xlu0 %v591
        %v593 = vpop.xlane.xlu0 %592
        %v594 = vsel %vm460, %v558, 0.0
        %595 = vadd.xlane.f32.xlu0 %v594
        %v596 = vpop.xlane.xlu0 %595
        %v597 = vsel %vm460, %v559, 0.0
        %598 = vadd.xlane.f32.xlu0 %v597
        %v599 = vpop.xlane.xlu0 %598
        %v600 = vsel %vm460, %v560, 0.0
        %601 = vadd.xlane.f32.xlu0 %v600
        %v602 = vpop.xlane.xlu0 %601
        %v603 = vsel %vm460, %v561, 0.0
        %604 = vadd.xlane.f32.xlu0 %v603
        %v605 = vpop.xlane.xlu0 %604
        %v606 = vsel %vm460, %v562, 0.0
        %607 = vadd.xlane.f32.xlu0 %v606
        %v608 = vpop.xlane.xlu0 %607
        %v609 = vsel %vm460, %v563, 0.0
        %610 = vadd.xlane.f32.xlu0 %v609
        %v611 = vpop.xlane.xlu0 %610
        %v612 = vmul.f32 %v566, %v515
        %v613 = vmul.f32 %v569, %v515
        %v614 = vmul.f32 %v572, %v515
        %v615 = vmul.f32 %v575, %v515
        %v616 = vmul.f32 %v578, %v515
        %v617 = vmul.f32 %v581, %v515
        %v618 = vmul.f32 %v584, %v515
        %v619 = vmul.f32 %v587, %v515
        %v620 = vmul.f32 %v590, %v515
        %v621 = vmul.f32 %v593, %v515
        %v622 = vmul.f32 %v596, %v515
        %v623 = vmul.f32 %v599, %v515
        %v624 = vmul.f32 %v602, %v515
        %v625 = vmul.f32 %v605, %v515
        %v626 = vmul.f32 %v608, %v515
        %v627 = vmul.f32 %v611, %v515
        %v628 = vadd.f32 %v612, 1e-05
        %v629 = vadd.f32 %v613, 1e-05
        %v630 = vadd.f32 %v614, 1e-05
        %v631 = vadd.f32 %v615, 1e-05
        %v632 = vadd.f32 %v616, 1e-05
        %v633 = vadd.f32 %v617, 1e-05
        %v634 = vadd.f32 %v618, 1e-05
        %v635 = vadd.f32 %v619, 1e-05
        %v636 = vadd.f32 %v620, 1e-05
        %v637 = vadd.f32 %v621, 1e-05
        %v638 = vadd.f32 %v622, 1e-05
        %v639 = vadd.f32 %v623, 1e-05
        %v640 = vadd.f32 %v624, 1e-05
        %v641 = vadd.f32 %v625, 1e-05
        %v642 = vadd.f32 %v626, 1e-05
        %v643 = vadd.f32 %v627, 1e-05
        %v644 = vrsqrt.pop %v628
        %v645 = vmul.f32 %v644, %v628
        %v646 = vmul.f32 %v645, %v644
        %v647 = vmul.f32 0.5, %v646
        %v648 = vsub.f32 1.5, %v647
        %v649 = vmul.f32 %v644, %v648
        %vm650 = vweird.f32 %v628
        %vm651 = vweird.f32 %v644
        %vm652 = vmor %vm650, %vm651
        %v653 = vsel %vm652, %v644, %v649
        %v654 = vrsqrt.pop %v629
        %v655 = vmul.f32 %v654, %v629
        %v656 = vmul.f32 %v655, %v654
        %v657 = vmul.f32 0.5, %v656
        %v658 = vsub.f32 1.5, %v657
        %v659 = vmul.f32 %v654, %v658
        %vm660 = vweird.f32 %v629
        %vm661 = vweird.f32 %v654
        %vm662 = vmor %vm660, %vm661
        %v663 = vsel %vm662, %v654, %v659
        %v664 = vrsqrt.pop %v630
        %v665 = vmul.f32 %v664, %v630
        %v666 = vmul.f32 %v665, %v664
        %v667 = vmul.f32 0.5, %v666
        %v668 = vsub.f32 1.5, %v667
        %v669 = vmul.f32 %v664, %v668
        %vm670 = vweird.f32 %v630
        %vm671 = vweird.f32 %v664
        %vm672 = vmor %vm670, %vm671
        %v673 = vsel %vm672, %v664, %v669
        %v674 = vrsqrt.pop %v631
        %v675 = vmul.f32 %v674, %v631
        %v676 = vmul.f32 %v675, %v674
        %v677 = vmul.f32 0.5, %v676
        %v678 = vsub.f32 1.5, %v677
        %v679 = vmul.f32 %v674, %v678
        %vm680 = vweird.f32 %v631
        %vm681 = vweird.f32 %v674
        %vm682 = vmor %vm680, %vm681
        %v683 = vsel %vm682, %v674, %v679
        %v684 = vrsqrt.pop %v632
        %v685 = vmul.f32 %v684, %v632
        %v686 = vmul.f32 %v685, %v684
        %v687 = vmul.f32 0.5, %v686
        %v688 = vsub.f32 1.5, %v687
        %v689 = vmul.f32 %v684, %v688
        %vm690 = vweird.f32 %v632
        %vm691 = vweird.f32 %v684
        %vm692 = vmor %vm690, %vm691
        %v693 = vsel %vm692, %v684, %v689
        %v694 = vrsqrt.pop %v633
        %v695 = vmul.f32 %v694, %v633
        %v696 = vmul.f32 %v695, %v694
        %v697 = vmul.f32 0.5, %v696
        %v698 = vsub.f32 1.5, %v697
        %v699 = vmul.f32 %v694, %v698
        %vm700 = vweird.f32 %v633
        %vm701 = vweird.f32 %v694
        %vm702 = vmor %vm700, %vm701
        %v703 = vsel %vm702, %v694, %v699
        %v704 = vrsqrt.pop %v634
        %v705 = vmul.f32 %v704, %v634
        %v706 = vmul.f32 %v705, %v704
        %v707 = vmul.f32 0.5, %v706
        %v708 = vsub.f32 1.5, %v707
        %v709 = vmul.f32 %v704, %v708
        %vm710 = vweird.f32 %v634
        %vm711 = vweird.f32 %v704
        %vm712 = vmor %vm710, %vm711
        %v713 = vsel %vm712, %v704, %v709
        %v714 = vrsqrt.pop %v635
        %v715 = vmul.f32 %v714, %v635
        %v716 = vmul.f32 %v715, %v714
        %v717 = vmul.f32 0.5, %v716
        %v718 = vsub.f32 1.5, %v717
        %v719 = vmul.f32 %v714, %v718
        %vm720 = vweird.f32 %v635
        %vm721 = vweird.f32 %v714
        %vm722 = vmor %vm720, %vm721
        %v723 = vsel %vm722, %v714, %v719
        %v724 = vrsqrt.pop %v636
        %v725 = vmul.f32 %v724, %v636
        %v726 = vmul.f32 %v725, %v724
        %v727 = vmul.f32 0.5, %v726
        %v728 = vsub.f32 1.5, %v727
        %v729 = vmul.f32 %v724, %v728
        %vm730 = vweird.f32 %v636
        %vm731 = vweird.f32 %v724
        %vm732 = vmor %vm730, %vm731
        %v733 = vsel %vm732, %v724, %v729
        %v734 = vrsqrt.pop %v637
        %v735 = vmul.f32 %v734, %v637
        %v736 = vmul.f32 %v735, %v734
        %v737 = vmul.f32 0.5, %v736
        %v738 = vsub.f32 1.5, %v737
        %v739 = vmul.f32 %v734, %v738
        %vm740 = vweird.f32 %v637
        %vm741 = vweird.f32 %v734
        %vm742 = vmor %vm740, %vm741
        %v743 = vsel %vm742, %v734, %v739
        %v744 = vrsqrt.pop %v638
        %v745 = vmul.f32 %v744, %v638
        %v746 = vmul.f32 %v745, %v744
        %v747 = vmul.f32 0.5, %v746
        %v748 = vsub.f32 1.5, %v747
        %v749 = vmul.f32 %v744, %v748
        %vm750 = vweird.f32 %v638
        %vm751 = vweird.f32 %v744
        %vm752 = vmor %vm750, %vm751
        %v753 = vsel %vm752, %v744, %v749
        %v754 = vrsqrt.pop %v639
        %v755 = vmul.f32 %v754, %v639
        %v756 = vmul.f32 %v755, %v754
        %v757 = vmul.f32 0.5, %v756
        %v758 = vsub.f32 1.5, %v757
        %v759 = vmul.f32 %v754, %v758
        %vm760 = vweird.f32 %v639
        %vm761 = vweird.f32 %v754
        %vm762 = vmor %vm760, %vm761
        %v763 = vsel %vm762, %v754, %v759
        %v764 = vrsqrt.pop %v640
        %v765 = vmul.f32 %v764, %v640
        %v766 = vmul.f32 %v765, %v764
        %v767 = vmul.f32 0.5, %v766
        %v768 = vsub.f32 1.5, %v767
        %v769 = vmul.f32 %v764, %v768
        %vm770 = vweird.f32 %v640
        %vm771 = vweird.f32 %v764
        %vm772 = vmor %vm770, %vm771
        %v773 = vsel %vm772, %v764, %v769
        %v774 = vrsqrt.pop %v641
        %v775 = vmul.f32 %v774, %v641
        %v776 = vmul.f32 %v775, %v774
        %v777 = vmul.f32 0.5, %v776
        %v778 = vsub.f32 1.5, %v777
        %v779 = vmul.f32 %v774, %v778
        %vm780 = vweird.f32 %v641
        %vm781 = vweird.f32 %v774
        %vm782 = vmor %vm780, %vm781
        %v783 = vsel %vm782, %v774, %v779
        %v784 = vrsqrt.pop %v642
        %v785 = vmul.f32 %v784, %v642
        %v786 = vmul.f32 %v785, %v784
        %v787 = vmul.f32 0.5, %v786
        %v788 = vsub.f32 1.5, %v787
        %v789 = vmul.f32 %v784, %v788
        %vm790 = vweird.f32 %v642
        %vm791 = vweird.f32 %v784
        %vm792 = vmor %vm790, %vm791
        %v793 = vsel %vm792, %v784, %v789
        %v794 = vrsqrt.pop %v643
        %v795 = vmul.f32 %v794, %v643
        %v796 = vmul.f32 %v795, %v794
        %v797 = vmul.f32 0.5, %v796
        %v798 = vsub.f32 1.5, %v797
        %v799 = vmul.f32 %v794, %v798
        %vm800 = vweird.f32 %v643
        %vm801 = vweird.f32 %v794
        %vm802 = vmor %vm800, %vm801
        %v803 = vsel %vm802, %v794, %v799
        %v804 = vmul.f32 %v532, %v653
        %v805 = vmul.f32 %v533, %v663
        %v806 = vmul.f32 %v534, %v673
        %v807 = vmul.f32 %v535, %v683
        %v808 = vmul.f32 %v536, %v693
        %v809 = vmul.f32 %v537, %v703
        %v810 = vmul.f32 %v538, %v713
        %v811 = vmul.f32 %v539, %v723
        %v812 = vmul.f32 %v540, %v733
        %v813 = vmul.f32 %v541, %v743
        %v814 = vmul.f32 %v542, %v753
        %v815 = vmul.f32 %v543, %v763
        %v816 = vmul.f32 %v544, %v773
        %v817 = vmul.f32 %v545, %v783
        %v818 = vmul.f32 %v546, %v793
        %v819 = vmul.f32 %v547, %v803
        %v820 = vperm.slane %v224, 1
        %v821 = vmul.f32 %v804, %v820
        %v822 = vmul.f32 %v805, %v820
        %v823 = vmul.f32 %v806, %v820
        %v824 = vmul.f32 %v807, %v820
        %v825 = vmul.f32 %v808, %v820
        %v826 = vmul.f32 %v809, %v820
        %v827 = vmul.f32 %v810, %v820
        %v828 = vmul.f32 %v811, %v820
        %v829 = vmul.f32 %v812, %v820
        %v830 = vmul.f32 %v813, %v820
        %v831 = vmul.f32 %v814, %v820
        %v832 = vmul.f32 %v815, %v820
        %v833 = vmul.f32 %v816, %v820
        %v834 = vmul.f32 %v817, %v820
        %v835 = vmul.f32 %v818, %v820
        %v836 = vmul.f32 %v819, %v820
        %v837 = vperm.slane %v224, 2
        %v838 = vadd.f32 %v821, %v837
        %v839 = vadd.f32 %v822, %v837
        %v840 = vadd.f32 %v823, %v837
        %v841 = vadd.f32 %v824, %v837
        %v842 = vadd.f32 %v825, %v837
        %v843 = vadd.f32 %v826, %v837
        %v844 = vadd.f32 %v827, %v837
        %v845 = vadd.f32 %v828, %v837
        %v846 = vadd.f32 %v829, %v837
        %v847 = vadd.f32 %v830, %v837
        %v848 = vadd.f32 %v831, %v837
        %v849 = vadd.f32 %v832, %v837
        %v850 = vadd.f32 %v833, %v837
        %v851 = vadd.f32 %v834, %v837
        %v852 = vadd.f32 %v835, %v837
        %v853 = vadd.f32 %v836, %v837
        %v854 = vpack.c.bf16 %v839, %v838
        %v855 = vpack.c.bf16 %v841, %v840
        %v856 = vpack.c.bf16 %v843, %v842
        %v857 = vpack.c.bf16 %v845, %v844
        %v858 = vpack.c.bf16 %v847, %v846
        %v859 = vpack.c.bf16 %v849, %v848
        %v860 = vpack.c.bf16 %v851, %v850
        %v861 = vpack.c.bf16 %v853, %v852
        %v870 = vunpack.c.l.b16 %v216
        %v871 = vunpack.c.l.b16 %v217
        %v872 = vunpack.c.l.b16 %v218
        %v873 = vunpack.c.l.b16 %v219
        %v874 = vunpack.c.l.b16 %v220
        %v875 = vunpack.c.l.b16 %v221
        %v876 = vunpack.c.l.b16 %v222
        %v877 = vunpack.c.l.b16 %v223
        %v878 = vpack.c.b16 %v871, %v870
        %v879 = vpack.c.b16 %v873, %v872
        %v880 = vpack.c.b16 %v875, %v874
        %v881 = vpack.c.b16 %v877, %v876
        %v887 = vsel %vm460, %v854, 0
        %v890 = vsel %vm460, %v855, 0
        %v893 = vsel %vm460, %v856, 0
        %v896 = vsel %vm460, %v857, 0
        %v899 = vsel %vm460, %v858, 0
        %v902 = vsel %vm460, %v859, 0
        %v905 = vsel %vm460, %v860, 0
        %v908 = vsel %vm460, %v861, 0
        %910 = vmatpush.bf16.msra.mxu0 0
        %911 = vmatpush.bf16.msra.mxu0 0
        %912 = vmatpush.bf16.msra.mxu0 0
        %913 = vmatpush.bf16.msra.mxu0 0
        %914 = vmatpush.bf16.msra.mxu0 %v881
        %915 = vmatpush.bf16.msra.mxu0 %v880
        %916 = vmatpush.bf16.msra.mxu0 %v879
        %917 = vmatpush.bf16.msra.mxu0 %v878
        %918 = vmatmul.bf16.gmra.mxu0 %v887
        %v919 = vpop.f32.mrf.mxu0
        %v920 = vadd.f32 0.0, %v919
        %v921 = vpop.f32.mrf.mxu0
        %v922 = vadd.f32 0.0, %v921
        %923 = vmatmul.bf16.gmra.mxu0 %v890
        %v924 = vpop.f32.mrf.mxu0
        %v925 = vadd.f32 0.0, %v924
        %v926 = vpop.f32.mrf.mxu0
        %v927 = vadd.f32 0.0, %v926
        %928 = vmatmul.bf16.gmra.mxu0 %v893
        %v929 = vpop.f32.mrf.mxu0
        %v930 = vadd.f32 0.0, %v929
        %v931 = vpop.f32.mrf.mxu0
        %v932 = vadd.f32 0.0, %v931
        %933 = vmatmul.bf16.gmra.mxu0 %v896
        %v934 = vpop.f32.mrf.mxu0
        %v935 = vadd.f32 0.0, %v934
        %v936 = vpop.f32.mrf.mxu0
        %v937 = vadd.f32 0.0, %v936
        %938 = vmatmul.bf16.gmra.mxu0 %v899
        %v939 = vpop.f32.mrf.mxu0
        %v940 = vadd.f32 0.0, %v939
        %v941 = vpop.f32.mrf.mxu0
        %v942 = vadd.f32 0.0, %v941
        %943 = vmatmul.bf16.gmra.mxu0 %v902
        %v944 = vpop.f32.mrf.mxu0
        %v945 = vadd.f32 0.0, %v944
        %v946 = vpop.f32.mrf.mxu0
        %v947 = vadd.f32 0.0, %v946
        %948 = vmatmul.bf16.gmra.mxu0 %v905
        %v949 = vpop.f32.mrf.mxu0
        %v950 = vadd.f32 0.0, %v949
        %v951 = vpop.f32.mrf.mxu0
        %v952 = vadd.f32 0.0, %v951
        %953 = vmatmul.bf16.gmra.mxu0 %v908
        %v954 = vpop.f32.mrf.mxu0
        %v955 = vadd.f32 0.0, %v954
        %v956 = vpop.f32.mrf.mxu0
        %v957 = vadd.f32 0.0, %v956
        %958 = vdwg.mxu0
        %s959 = sshra.s32 %s197, 3
        %s960 = sand.u32 %s197, 7
        %s961 = smul.addr %s959, 4
        %s962 = scalar_lea.vmem %s0, %s961
        %v963 = vld [vmem:[%s962] sm:$0xf]
        %v964 = vld [vmem:[%s962 + $0x4] sm:$0xf]
        %v965 = vld [vmem:[%s962 + $0x8] sm:$0xf]
        %v966 = vld [vmem:[%s962 + $0xc] sm:$0xf]
        %v967 = vld [vmem:[%s962 + $0x10] sm:$0xf]
        %v968 = vld [vmem:[%s962 + $0x14] sm:$0xf]
        %v969 = vld [vmem:[%s962 + $0x18] sm:$0xf]
        %v970 = vld [vmem:[%s962 + $0x1c] sm:$0xf]
        %v971 = vunpack.c.l.bf16 %v963
        %v972 = vunpack.c.l.bf16 %v964
        %v973 = vunpack.c.l.bf16 %v965
        %v974 = vunpack.c.l.bf16 %v966
        %v975 = vunpack.c.l.bf16 %v967
        %v976 = vunpack.c.l.bf16 %v968
        %v977 = vunpack.c.l.bf16 %v969
        %v978 = vunpack.c.l.bf16 %v970
        %v979 = vperm.slane %v225, 0
        %980 = vmatpush.msra.mxu0 %v957
        %981 = vmatpush.msra.mxu0 %v955
        %982 = vmatpush.msra.mxu0 %v952
        %983 = vmatpush.msra.mxu0 %v950
        %984 = vmatpush.msra.mxu0 %v947
        %985 = vmatpush.msra.mxu0 %v945
        %986 = vmatpush.msra.mxu0 %v942
        %987 = vmatpush.msra.mxu0 %v940
        %988 = vmatpush.msra.mxu0 %v937
        %989 = vmatpush.msra.mxu0 %v935
        %990 = vmatpush.msra.mxu0 %v932
        %991 = vmatpush.msra.mxu0 %v930
        %992 = vmatpush.msra.mxu0 %v927
        %993 = vmatpush.msra.mxu0 %v925
        %994 = vmatpush.msra.mxu0 %v922
        %995 = vmatpush.msra.mxu0 %v920
        %996 = vmatmul.f32.gmra.mxu0 %v971
        %v997 = vpop.f32.mrf.mxu0
        %v998 = vadd.f32 %v979, %v997
        %999 = vmatmul.f32.gmra.mxu0 %v972
        %v1000 = vpop.f32.mrf.mxu0
        %v1001 = vadd.f32 %v979, %v1000
        %1002 = vmatmul.f32.gmra.mxu0 %v973
        %v1003 = vpop.f32.mrf.mxu0
        %v1004 = vadd.f32 %v979, %v1003
        %1005 = vmatmul.f32.gmra.mxu0 %v974
        %v1006 = vpop.f32.mrf.mxu0
        %v1007 = vadd.f32 %v979, %v1006
        %1008 = vmatmul.f32.gmra.mxu0 %v975
        %v1009 = vpop.f32.mrf.mxu0
        %v1010 = vadd.f32 %v979, %v1009
        %1011 = vmatmul.f32.gmra.mxu0 %v976
        %v1012 = vpop.f32.mrf.mxu0
        %v1013 = vadd.f32 %v979, %v1012
        %1014 = vmatmul.f32.gmra.mxu0 %v977
        %v1015 = vpop.f32.mrf.mxu0
        %v1016 = vadd.f32 %v979, %v1015
        %1017 = vmatmul.f32.gmra.mxu0 %v978
        %v1018 = vpop.f32.mrf.mxu0
        %v1019 = vadd.f32 %v979, %v1018
        %1020 = vdwg.mxu0
        %v1021 = vmax.f32 %v998, 0.0
        %v1022 = vmax.f32 %v1001, 0.0
        %v1023 = vmax.f32 %v1004, 0.0
        %v1024 = vmax.f32 %v1007, 0.0
        %v1025 = vmax.f32 %v1010, 0.0
        %v1026 = vmax.f32 %v1013, 0.0
        %v1027 = vmax.f32 %v1016, 0.0
        %v1028 = vmax.f32 %v1019, 0.0
        %vm1029 = vcmask 261120
        %1030 = vst.msk [vmem:[%s194] sm:$0xff] %vm1029, %v1021
        %1031 = vst.msk [vmem:[%s194 + $0x8] sm:$0xff] %vm1029, %v1022
        %1032 = vst.msk [vmem:[%s194 + $0x10] sm:$0xff] %vm1029, %v1023
        %1033 = vst.msk [vmem:[%s194 + $0x18] sm:$0xff] %vm1029, %v1024
        %1034 = vst.msk [vmem:[%s194 + $0x20] sm:$0xff] %vm1029, %v1025
        %1035 = vst.msk [vmem:[%s194 + $0x28] sm:$0xff] %vm1029, %v1026
        %1036 = vst.msk [vmem:[%s194 + $0x30] sm:$0xff] %vm1029, %v1027
        %1037 = vst.msk [vmem:[%s194 + $0x38] sm:$0xff] %vm1029, %v1028
        %s1038 = smul.u32 8, %s16
        %p1039 = scmp.lt.s32.totalorder %s1038, 15
        %s1040 = scalar_select %p1039, %s1038, 15
        %s1041 = smul.addr %s1040, 8
        %s1042 = scalar_lea.vmem %s4, %s1041
        // Predicated region
        $region41: #{tpu_custom_call.1} parent=35 // pred_check
          %p1043 = pneg %p118
        $region42: #{tpu_custom_call.1} parent=35 // pred_check_branch
          %1045 = sbr.rel (%p1043) target = $region44
        $region43: #{tpu_custom_call.1} parent=35 // pred_region
          %s1046 = smul.u32 8, %s16
        $region44: #{tpu_custom_call.1} parent=35 // pred_fallthru
          _
      $region36: #{tpu_custom_call.1} parent=5 // pred_fallthru
        _
      %p1047 = scmp.le.s32.totalorder 2, %s11
      // Predicated region
      $region45: #{tpu_custom_call.1} parent=5 // pred_check
        %p1048 = pneg %p1047
      $region46: #{tpu_custom_call.1} parent=5 // pred_check_branch
        %1050 = sbr.rel (%p1048) target = $region48
      $region47: #{tpu_custom_call.1} parent=5 // pred_region
        %s1051 = ssub.s32 %s11, 2
        // Predicated region
        $region49: #{tpu_custom_call.1} parent=47 // pred_check
          %p1052 = pneg %p124
        $region50: #{tpu_custom_call.1} parent=47 // pred_check_branch
          %1054 = sbr.rel (%p1052) target = $region52
        $region51: #{tpu_custom_call.1} parent=47 // pred_region
          %s1055 = smul.u32 8, %s17
          %p1056 = scmp.lt.s32.totalorder %s1055, 15
          %s1057 = scalar_select %p1056, %s1055, 15
          %s1058 = smul.addr %s1057, 8
          %s1059 = scalar_lea.vmem %s4, %s1058
        $region52: #{tpu_custom_call.1} parent=47 // pred_fallthru
          _
      $region48: #{tpu_custom_call.1} parent=5 // pred_fallthru
        _
    $region6: #{tpu_custom_call.1} parent=1 // loop_footer
      %s15 = sadd.s32 1, %s11
    $region7: #{tpu_custom_call.1} parent=1 // loop_footer_branch
      %10 = sbr.rel target = $region3
    $region8: #{tpu_custom_call.1} parent=1 // loop_exit
      _
    %1060 = vsyncpa [#allocation3], 1
    %s1061 = scalar_lea.sflag [#allocation3], 1
    %1062 = vsyncpa %s1061, 1

</llo_original>
